<compile_context>
chip_gen: v6e
topology: v6e:2x2x1
jax: 0.10.0
libtpu: 0.0.40
codegen_flags: <defaults>
</compile_context>

<pallas_src>
import jax
import jax.numpy as jnp
from jax import lax
from jax.experimental import pallas as pl
from jax.experimental.pallas import tpu as pltpu


def gaze_kernel(feats_ref, w1_ref, b1_ref, w2_ref, b2_ref,
                w3_ref, b3_ref, w4_ref, b4_ref, out_ref):
    """One grid step: `bt` batch elements, 4-layer MLP + spatial softmax.

    feats_ref : (bt, N, D)        patch tokens (compute dtype, e.g. bf16)
    wK_ref    : PyTorch-layout Linear weights (out_dim, in_dim); w4 as (H3, 1)
    bK_ref    : (out_dim, 1) f32 bias columns; b4 as (1, 1)
    out_ref   : (bt, N) f32 softmax probabilities, lane-dense
    """
    bt = feats_ref.shape[0]
    rows = []
    for b in range(bt):                      # static unroll, bt <= 8
        x = feats_ref[b]                     # (N, D), tokens on sublanes
        # Layer 1: contract both operands on their minor (D) axis so the N=256
        # tokens land on the lane axis of the result: (H1, N).
        h = lax.dot_general(
            w1_ref[...], x,
            dimension_numbers=(((1,), (1,)), ((), ())),
            preferred_element_type=jnp.float32)
        h = jnp.maximum(h + b1_ref[...], 0.0)                 # (H1, N) f32
        h = jnp.dot(w2_ref[...], h.astype(w2_ref.dtype),
                    preferred_element_type=jnp.float32)
        h = jnp.maximum(h + b2_ref[...], 0.0)                 # (H2, N) f32
        h = jnp.dot(w3_ref[...], h.astype(w3_ref.dtype),
                    preferred_element_type=jnp.float32)
        h = jnp.maximum(h + b3_ref[...], 0.0)                 # (H3, N) f32

        # Final (H3 -> 1) layer: VPU multiply + sublane reduce; result stays
        # lane-dense (1, N) — no 1-column MXU matmul, no relayout needed.
        logits = jnp.sum(h * w4_ref[...], axis=0, keepdims=True) + b4_ref[...]

        # Spatial softmax over the N patch positions (lane axis, XLU reduces).
        m = jnp.max(logits, axis=-1, keepdims=True)
        e = jnp.exp(logits - m)
        denom = jnp.sum(e, axis=-1, keepdims=True)
        rows.append(e * pl.reciprocal(denom, approx=True))    # (1, N) f32

    out_ref[...] = jnp.concatenate(rows, axis=0).astype(out_ref.dtype)


def gaze_predictor(feats, params, *, compute_dtype=jnp.bfloat16, batch_tile=None):
    """feats: (B, N, D) f32 patch tokens. Returns (B, N) spatial softmax probs."""
    B, N, D = feats.shape
    w1, b1, w2, b2, w3, b3, w4, b4 = params

    # bf16 on the MXU path (features + W1..W3); f32 everywhere elementwise.
    feats_c = feats.astype(compute_dtype)
    w1c, w2c, w3c = (w.astype(compute_dtype) for w in (w1, w2, w3))
    b1c, b2c, b3c = (b.reshape(-1, 1).astype(jnp.float32) for b in (b1, b2, b3))
    w4c = w4.reshape(-1, 1).astype(jnp.float32)   # (H3, 1) column (nn.Linear weight is (1, H3))
    b4c = b4.reshape(1, 1).astype(jnp.float32)

    # Fattened grid: several batch elements per grid step.  For B >= 2*bt the
    # grid has >= 2 "parallel" steps (keeps both v7x TensorCores busy).
    if batch_tile is None:
        batch_tile = min(B, 8)
    assert B % batch_tile == 0, "batch must be divisible by batch_tile"
    grid = (B // batch_tile,)

    # Grid-invariant weights/biases: constant index_map => fetched once by the
    # pipeline.  (Could also mark them single-buffered; tiny, so omitted.)
    full = lambda a: pl.BlockSpec(a.shape, lambda i: (0,) * a.ndim)

    out = pl.pallas_call(
        gaze_kernel,
        out_shape=jax.ShapeDtypeStruct((B, N), jnp.float32),
        grid=grid,
        in_specs=[
            pl.BlockSpec((batch_tile, N, D), lambda i: (i, 0, 0)),
            full(w1c), full(b1c), full(w2c), full(b2c),
            full(w3c), full(b3c), full(w4c), full(b4c),
        ],
        out_specs=pl.BlockSpec((batch_tile, N), lambda i: (i, 0)),
        compiler_params=pltpu.CompilerParams(dimension_semantics=("parallel",)),
    )(feats_c, w1c, b1c, w2c, b2c, w3c, b3c, w4c, b4c)

    return out


def init_params(key, in_dim, hidden_dims):
    """nn.Linear-style init; weights in PyTorch layout (out_dim, in_dim)."""
    dims = [in_dim] + list(hidden_dims) + [1]
    params = []
    for i in range(len(dims) - 1):
        key, kw, kb = jax.random.split(key, 3)
        scale = 1.0 / jnp.sqrt(dims[i])
        w = jax.random.uniform(kw, (dims[i + 1], dims[i]), jnp.float32, -scale, scale)
        b = jax.random.uniform(kb, (dims[i + 1],), jnp.float32, -scale, scale)
        params += [w, b]
    return params


def reference(feats, params, compute_dtype=jnp.bfloat16):
    """Pure-JAX reference mimicking the kernel's mixed precision."""
    w1, b1, w2, b2, w3, b3, w4, b4 = params

    def lin(x, w, b):
        return jnp.dot(x.astype(compute_dtype), w.T.astype(compute_dtype),
                       preferred_element_type=jnp.float32) + b

    h = jnp.maximum(lin(feats, w1, b1), 0.0)
    h = jnp.maximum(lin(h, w2, b2), 0.0)
    h = jnp.maximum(lin(h, w3, b3), 0.0)                                   # (B, N, H3) f32
    logits = (jnp.dot(h, w4.T, preferred_element_type=jnp.float32) + b4)[..., 0]
    return jax.nn.softmax(logits, axis=1)


if __name__ == "__main__":
    B = 2
    N = 16 * 16          # 256 patch tokens, as the forward pass implies
    D = 32               # feature_dims (small synthetic stand-in for DINOv2)
    hidden_dims = [64, 32, 16]

    key = jax.random.PRNGKey(0)
    k_feat, k_par = jax.random.split(key)
    feats = jax.random.normal(k_feat, (B, N, D), jnp.float32)
    params = init_params(k_par, D, hidden_dims)

    probs = gaze_predictor(feats, params)
    probs = jax.block_until_ready(probs)

    ref = reference(feats, params)
    assert probs.shape == (B, N)
    # Tolerances account for bf16 matmul inputs + approx EUP reciprocal.
    assert jnp.allclose(jnp.sum(probs, axis=1), 1.0, atol=1e-2)
    assert jnp.allclose(probs, ref, atol=2e-3, rtol=2e-2)
    assert jnp.array_equal(jnp.argmax(probs, axis=1), jnp.argmax(ref, axis=1))

    print("KERNEL_OK")
</pallas_src>

<mosaic_0001>
module attributes {stable_mosaic.version = 11 : i64} {
  func.func @gaze_kernel(%arg0: i32, %arg1: memref<2x256x32xbf16, #tpu.memory_space<vmem>>, %arg2: memref<64x32xbf16, #tpu.memory_space<vmem>>, %arg3: memref<64x1xf32, #tpu.memory_space<vmem>>, %arg4: memref<32x64xbf16, #tpu.memory_space<vmem>>, %arg5: memref<32x1xf32, #tpu.memory_space<vmem>>, %arg6: memref<16x32xbf16, #tpu.memory_space<vmem>>, %arg7: memref<16x1xf32, #tpu.memory_space<vmem>>, %arg8: memref<16x1xf32, #tpu.memory_space<vmem>>, %arg9: memref<1x1xf32, #tpu.memory_space<vmem>>, %arg10: memref<2x256xf32, #tpu.memory_space<vmem>>) attributes {dimension_semantics = [#tpu.dimension_semantics<parallel>], iteration_bounds = array<i64: 1>, scalar_prefetch = 0 : i64, scratch_operands = 0 : i64, tpu.core_type = #tpu.core_type<tc>, window_params = [{transform_indices = @transform_0, window_bounds = array<i64: 2, 256, 32>}, {pipeline_mode = #tpu.pipeline_mode<synchronous>, transform_indices = @transform_1, window_bounds = array<i64: 64, 32>}, {pipeline_mode = #tpu.pipeline_mode<synchronous>, transform_indices = @transform_2, window_bounds = array<i64: 64, 1>}, {pipeline_mode = #tpu.pipeline_mode<synchronous>, transform_indices = @transform_3, window_bounds = array<i64: 32, 64>}, {pipeline_mode = #tpu.pipeline_mode<synchronous>, transform_indices = @transform_4, window_bounds = array<i64: 32, 1>}, {pipeline_mode = #tpu.pipeline_mode<synchronous>, transform_indices = @transform_5, window_bounds = array<i64: 16, 32>}, {pipeline_mode = #tpu.pipeline_mode<synchronous>, transform_indices = @transform_6, window_bounds = array<i64: 16, 1>}, {pipeline_mode = #tpu.pipeline_mode<synchronous>, transform_indices = @transform_7, window_bounds = array<i64: 16, 1>}, {pipeline_mode = #tpu.pipeline_mode<synchronous>, transform_indices = @transform_8, window_bounds = array<i64: 1, 1>}, {transform_indices = @transform_9, window_bounds = array<i64: 2, 256>}]} {
    %c0 = arith.constant 0 : index
    %c0_0 = arith.constant 0 : index
    %c0_1 = arith.constant 0 : index
    %0 = vector.load %arg1[%c0, %c0_0, %c0_1] : memref<2x256x32xbf16, #tpu.memory_space<vmem>>, vector<1x256x32xbf16>
    %1 = vector.shape_cast %0 : vector<1x256x32xbf16> to vector<256x32xbf16>
    %c0_2 = arith.constant 0 : index
    %c0_3 = arith.constant 0 : index
    %2 = vector.load %arg2[%c0_2, %c0_3] : memref<64x32xbf16, #tpu.memory_space<vmem>>, vector<64x32xbf16>
    %cst = arith.constant dense<0.000000e+00> : vector<64x256xf32>
    %3 = tpu.matmul %2, %1, %cst {dimension_numbers = #tpu.dot_dimension_numbers<[1], [1], [0], [0], [0, 0, 1, 0], [], []>} : vector<64x32xbf16>, vector<256x32xbf16>, vector<64x256xf32> -> vector<64x256xf32>
    %c0_4 = arith.constant 0 : index
    %c0_5 = arith.constant 0 : index
    %4 = vector.load %arg3[%c0_4, %c0_5] : memref<64x1xf32, #tpu.memory_space<vmem>>, vector<64x1xf32>
    %5 = vector.broadcast %4 : vector<64x1xf32> to vector<64x256xf32>
    %6 = arith.addf %3, %5 : vector<64x256xf32>
    %cst_6 = arith.constant 0.000000e+00 : f32
    %7 = vector.broadcast %cst_6 : f32 to vector<64x256xf32>
    %8 = arith.maximumf %6, %7 : vector<64x256xf32>
    %c0_7 = arith.constant 0 : index
    %c0_8 = arith.constant 0 : index
    %9 = vector.load %arg4[%c0_7, %c0_8] : memref<32x64xbf16, #tpu.memory_space<vmem>>, vector<32x64xbf16>
    %10 = arith.truncf %8 : vector<64x256xf32> to vector<64x256xbf16>
    %cst_9 = arith.constant dense<0.000000e+00> : vector<32x256xf32>
    %11 = tpu.matmul %9, %10, %cst_9 {dimension_numbers = #tpu.dot_dimension_numbers<[1], [0], [0], [1], [0, 0, 1, 1], [], []>} : vector<32x64xbf16>, vector<64x256xbf16>, vector<32x256xf32> -> vector<32x256xf32>
    %c0_10 = arith.constant 0 : index
    %c0_11 = arith.constant 0 : index
    %12 = vector.load %arg5[%c0_10, %c0_11] : memref<32x1xf32, #tpu.memory_space<vmem>>, vector<32x1xf32>
    %13 = vector.broadcast %12 : vector<32x1xf32> to vector<32x256xf32>
    %14 = arith.addf %11, %13 : vector<32x256xf32>
    %cst_12 = arith.constant 0.000000e+00 : f32
    %15 = vector.broadcast %cst_12 : f32 to vector<32x256xf32>
    %16 = arith.maximumf %14, %15 : vector<32x256xf32>
    %c0_13 = arith.constant 0 : index
    %c0_14 = arith.constant 0 : index
    %17 = vector.load %arg6[%c0_13, %c0_14] : memref<16x32xbf16, #tpu.memory_space<vmem>>, vector<16x32xbf16>
    %18 = arith.truncf %16 : vector<32x256xf32> to vector<32x256xbf16>
    %cst_15 = arith.constant dense<0.000000e+00> : vector<16x256xf32>
    %19 = tpu.matmul %17, %18, %cst_15 {dimension_numbers = #tpu.dot_dimension_numbers<[1], [0], [0], [1], [0, 0, 1, 1], [], []>} : vector<16x32xbf16>, vector<32x256xbf16>, vector<16x256xf32> -> vector<16x256xf32>
    %c0_16 = arith.constant 0 : index
    %c0_17 = arith.constant 0 : index
    %20 = vector.load %arg7[%c0_16, %c0_17] : memref<16x1xf32, #tpu.memory_space<vmem>>, vector<16x1xf32>
    %21 = vector.broadcast %20 : vector<16x1xf32> to vector<16x256xf32>
    %22 = arith.addf %19, %21 : vector<16x256xf32>
    %cst_18 = arith.constant 0.000000e+00 : f32
    %23 = vector.broadcast %cst_18 : f32 to vector<16x256xf32>
    %24 = arith.maximumf %22, %23 : vector<16x256xf32>
    %c0_19 = arith.constant 0 : index
    %c0_20 = arith.constant 0 : index
    %25 = vector.load %arg8[%c0_19, %c0_20] : memref<16x1xf32, #tpu.memory_space<vmem>>, vector<16x1xf32>
    %26 = vector.broadcast %25 : vector<16x1xf32> to vector<16x256xf32>
    %27 = arith.mulf %24, %26 : vector<16x256xf32>
    %cst_21 = arith.constant dense<0.000000e+00> : vector<256xf32>
    %28 = vector.multi_reduction <add>, %27, %cst_21 [0] : vector<16x256xf32> to vector<256xf32>
    %29 = vector.shape_cast %28 : vector<256xf32> to vector<1x256xf32>
    %c0_22 = arith.constant 0 : index
    %c0_23 = arith.constant 0 : index
    %30 = vector.load %arg9[%c0_22, %c0_23] : memref<1x1xf32, #tpu.memory_space<vmem>>, vector<1x1xf32>
    %31 = vector.broadcast %30 : vector<1x1xf32> to vector<1x256xf32>
    %32 = arith.addf %29, %31 : vector<1x256xf32>
    %cst_24 = arith.constant dense<0xFF800000> : vector<1xf32>
    %33 = vector.multi_reduction <maximumf>, %32, %cst_24 [1] : vector<1x256xf32> to vector<1xf32>
    %34 = vector.shape_cast %33 : vector<1xf32> to vector<1x1xf32>
    %35 = vector.broadcast %34 : vector<1x1xf32> to vector<1x256xf32>
    %36 = arith.subf %32, %35 : vector<1x256xf32>
    %37 = math.exp %36 : vector<1x256xf32>
    %cst_25 = arith.constant dense<0.000000e+00> : vector<1xf32>
    %38 = vector.multi_reduction <add>, %37, %cst_25 [1] : vector<1x256xf32> to vector<1xf32>
    %39 = vector.shape_cast %38 : vector<1xf32> to vector<1x1xf32>
    %40 = tpu.reciprocal %39 {approx = true} : vector<1x1xf32> -> vector<1x1xf32>
    %41 = vector.broadcast %40 : vector<1x1xf32> to vector<1x256xf32>
    %42 = arith.mulf %37, %41 : vector<1x256xf32>
    %c1 = arith.constant 1 : index
    %c0_26 = arith.constant 0 : index
    %c0_27 = arith.constant 0 : index
    %43 = vector.load %arg1[%c1, %c0_26, %c0_27] : memref<2x256x32xbf16, #tpu.memory_space<vmem>>, vector<1x256x32xbf16>
    %44 = vector.shape_cast %43 : vector<1x256x32xbf16> to vector<256x32xbf16>
    %c0_28 = arith.constant 0 : index
    %c0_29 = arith.constant 0 : index
    %45 = vector.load %arg2[%c0_28, %c0_29] : memref<64x32xbf16, #tpu.memory_space<vmem>>, vector<64x32xbf16>
    %cst_30 = arith.constant dense<0.000000e+00> : vector<64x256xf32>
    %46 = tpu.matmul %45, %44, %cst_30 {dimension_numbers = #tpu.dot_dimension_numbers<[1], [1], [0], [0], [0, 0, 1, 0], [], []>} : vector<64x32xbf16>, vector<256x32xbf16>, vector<64x256xf32> -> vector<64x256xf32>
    %c0_31 = arith.constant 0 : index
    %c0_32 = arith.constant 0 : index
    %47 = vector.load %arg3[%c0_31, %c0_32] : memref<64x1xf32, #tpu.memory_space<vmem>>, vector<64x1xf32>
    %48 = vector.broadcast %47 : vector<64x1xf32> to vector<64x256xf32>
    %49 = arith.addf %46, %48 : vector<64x256xf32>
    %cst_33 = arith.constant 0.000000e+00 : f32
    %50 = vector.broadcast %cst_33 : f32 to vector<64x256xf32>
    %51 = arith.maximumf %49, %50 : vector<64x256xf32>
    %c0_34 = arith.constant 0 : index
    %c0_35 = arith.constant 0 : index
    %52 = vector.load %arg4[%c0_34, %c0_35] : memref<32x64xbf16, #tpu.memory_space<vmem>>, vector<32x64xbf16>
    %53 = arith.truncf %51 : vector<64x256xf32> to vector<64x256xbf16>
    %cst_36 = arith.constant dense<0.000000e+00> : vector<32x256xf32>
    %54 = tpu.matmul %52, %53, %cst_36 {dimension_numbers = #tpu.dot_dimension_numbers<[1], [0], [0], [1], [0, 0, 1, 1], [], []>} : vector<32x64xbf16>, vector<64x256xbf16>, vector<32x256xf32> -> vector<32x256xf32>
    %c0_37 = arith.constant 0 : index
    %c0_38 = arith.constant 0 : index
    %55 = vector.load %arg5[%c0_37, %c0_38] : memref<32x1xf32, #tpu.memory_space<vmem>>, vector<32x1xf32>
    %56 = vector.broadcast %55 : vector<32x1xf32> to vector<32x256xf32>
    %57 = arith.addf %54, %56 : vector<32x256xf32>
    %cst_39 = arith.constant 0.000000e+00 : f32
    %58 = vector.broadcast %cst_39 : f32 to vector<32x256xf32>
    %59 = arith.maximumf %57, %58 : vector<32x256xf32>
    %c0_40 = arith.constant 0 : index
    %c0_41 = arith.constant 0 : index
    %60 = vector.load %arg6[%c0_40, %c0_41] : memref<16x32xbf16, #tpu.memory_space<vmem>>, vector<16x32xbf16>
    %61 = arith.truncf %59 : vector<32x256xf32> to vector<32x256xbf16>
    %cst_42 = arith.constant dense<0.000000e+00> : vector<16x256xf32>
    %62 = tpu.matmul %60, %61, %cst_42 {dimension_numbers = #tpu.dot_dimension_numbers<[1], [0], [0], [1], [0, 0, 1, 1], [], []>} : vector<16x32xbf16>, vector<32x256xbf16>, vector<16x256xf32> -> vector<16x256xf32>
    %c0_43 = arith.constant 0 : index
    %c0_44 = arith.constant 0 : index
    %63 = vector.load %arg7[%c0_43, %c0_44] : memref<16x1xf32, #tpu.memory_space<vmem>>, vector<16x1xf32>
    %64 = vector.broadcast %63 : vector<16x1xf32> to vector<16x256xf32>
    %65 = arith.addf %62, %64 : vector<16x256xf32>
    %cst_45 = arith.constant 0.000000e+00 : f32
    %66 = vector.broadcast %cst_45 : f32 to vector<16x256xf32>
    %67 = arith.maximumf %65, %66 : vector<16x256xf32>
    %c0_46 = arith.constant 0 : index
    %c0_47 = arith.constant 0 : index
    %68 = vector.load %arg8[%c0_46, %c0_47] : memref<16x1xf32, #tpu.memory_space<vmem>>, vector<16x1xf32>
    %69 = vector.broadcast %68 : vector<16x1xf32> to vector<16x256xf32>
    %70 = arith.mulf %67, %69 : vector<16x256xf32>
    %cst_48 = arith.constant dense<0.000000e+00> : vector<256xf32>
    %71 = vector.multi_reduction <add>, %70, %cst_48 [0] : vector<16x256xf32> to vector<256xf32>
    %72 = vector.shape_cast %71 : vector<256xf32> to vector<1x256xf32>
    %c0_49 = arith.constant 0 : index
    %c0_50 = arith.constant 0 : index
    %73 = vector.load %arg9[%c0_49, %c0_50] : memref<1x1xf32, #tpu.memory_space<vmem>>, vector<1x1xf32>
    %74 = vector.broadcast %73 : vector<1x1xf32> to vector<1x256xf32>
    %75 = arith.addf %72, %74 : vector<1x256xf32>
    %cst_51 = arith.constant dense<0xFF800000> : vector<1xf32>
    %76 = vector.multi_reduction <maximumf>, %75, %cst_51 [1] : vector<1x256xf32> to vector<1xf32>
    %77 = vector.shape_cast %76 : vector<1xf32> to vector<1x1xf32>
    %78 = vector.broadcast %77 : vector<1x1xf32> to vector<1x256xf32>
    %79 = arith.subf %75, %78 : vector<1x256xf32>
    %80 = math.exp %79 : vector<1x256xf32>
    %cst_52 = arith.constant dense<0.000000e+00> : vector<1xf32>
    %81 = vector.multi_reduction <add>, %80, %cst_52 [1] : vector<1x256xf32> to vector<1xf32>
    %82 = vector.shape_cast %81 : vector<1xf32> to vector<1x1xf32>
    %83 = tpu.reciprocal %82 {approx = true} : vector<1x1xf32> -> vector<1x1xf32>
    %84 = vector.broadcast %83 : vector<1x1xf32> to vector<1x256xf32>
    %85 = arith.mulf %80, %84 : vector<1x256xf32>
    %86 = tpu.concatenate %42, %85 in 0 : vector<1x256xf32>, vector<1x256xf32> -> vector<2x256xf32>
    %c0_53 = arith.constant 0 : index
    %c0_54 = arith.constant 0 : index
    %87 = vector.load %arg10[%c0_53, %c0_54] : memref<2x256xf32, #tpu.memory_space<vmem>>, vector<2x256xf32>
    tpu.vector_store %arg10[%c0_53, %c0_54], %86 {strides = array<i32>} : memref<2x256xf32, #tpu.memory_space<vmem>>, vector<2x256xf32>,
    return
  }
  func.func @transform_0(%arg0: i32) -> (i32, i32, i32) {
    %c0_i32 = arith.constant 0 : i32
    %c0_i32_0 = arith.constant 0 : i32
    %c0_i32_1 = arith.constant 0 : i32
    return %arg0, %c0_i32, %c0_i32_0 : i32, i32, i32
  }
  func.func @transform_1(%arg0: i32) -> (i32, i32) {
    %c0_i32 = arith.constant 0 : i32
    %c0_i32_0 = arith.constant 0 : i32
    %c0_i32_1 = arith.constant 0 : i32
    return %c0_i32, %c0_i32_0 : i32, i32
  }
  func.func @transform_2(%arg0: i32) -> (i32, i32) {
    %c0_i32 = arith.constant 0 : i32
    %c0_i32_0 = arith.constant 0 : i32
    %c0_i32_1 = arith.constant 0 : i32
    return %c0_i32, %c0_i32_0 : i32, i32
  }
  func.func @transform_3(%arg0: i32) -> (i32, i32) {
    %c0_i32 = arith.constant 0 : i32
    %c0_i32_0 = arith.constant 0 : i32
    %c0_i32_1 = arith.constant 0 : i32
    return %c0_i32, %c0_i32_0 : i32, i32
  }
  func.func @transform_4(%arg0: i32) -> (i32, i32) {
    %c0_i32 = arith.constant 0 : i32
    %c0_i32_0 = arith.constant 0 : i32
    %c0_i32_1 = arith.constant 0 : i32
    return %c0_i32, %c0_i32_0 : i32, i32
  }
  func.func @transform_5(%arg0: i32) -> (i32, i32) {
    %c0_i32 = arith.constant 0 : i32
    %c0_i32_0 = arith.constant 0 : i32
    %c0_i32_1 = arith.constant 0 : i32
    return %c0_i32, %c0_i32_0 : i32, i32
  }
  func.func @transform_6(%arg0: i32) -> (i32, i32) {
    %c0_i32 = arith.constant 0 : i32
    %c0_i32_0 = arith.constant 0 : i32
    %c0_i32_1 = arith.constant 0 : i32
    return %c0_i32, %c0_i32_0 : i32, i32
  }
  func.func @transform_7(%arg0: i32) -> (i32, i32) {
    %c0_i32 = arith.constant 0 : i32
    %c0_i32_0 = arith.constant 0 : i32
    %c0_i32_1 = arith.constant 0 : i32
    return %c0_i32, %c0_i32_0 : i32, i32
  }
  func.func @transform_8(%arg0: i32) -> (i32, i32) {
    %c0_i32 = arith.constant 0 : i32
    %c0_i32_0 = arith.constant 0 : i32
    %c0_i32_1 = arith.constant 0 : i32
    return %c0_i32, %c0_i32_0 : i32, i32
  }
  func.func @transform_9(%arg0: i32) -> (i32, i32) {
    %c0_i32 = arith.constant 0 : i32
    %c0_i32_0 = arith.constant 0 : i32
    return %arg0, %c0_i32 : i32, i32
  }
}

</mosaic_0001>

<llo_original>
// kernel: tpu_custom_call.1
$region0: #{tpu_custom_call.1}
  #allocation0 [shape = 'u32[]', space=smem, size = 0x4, offset = 0x4, fixed_abs, tag = 'smem constant byte address 0x4 - core index']
  #allocation1 [shape = 'u32[144,128]{1,0:T(1,128)}', space=vmem, size = 0x12000, scoped, tag = 'internal scratch']
  #allocation2 [shape = 'f32[1,1]{1,0:T(1,128)S(1)}', space=vmem, size = 0x200, scoped, tag = 'scoped memory for tpu_custom_call.1']
  %s0 = inlined_call_operand.vmem [shape: bf16[2,256,32], index: 0, kind: input, shape index: {}]
  %s1 = inlined_call_operand.vmem [shape: bf16[64,32], index: 1, kind: input, shape index: {}]
  %s2 = inlined_call_operand.vmem [shape: f32[64,1], index: 2, kind: input, shape index: {}]
  %s3 = inlined_call_operand.vmem [shape: bf16[32,64], index: 3, kind: input, shape index: {}]
  %s4 = inlined_call_operand.vmem [shape: f32[32,1], index: 4, kind: input, shape index: {}]
  %s5 = inlined_call_operand.vmem [shape: bf16[16,32], index: 5, kind: input, shape index: {}]
  %s6 = inlined_call_operand.vmem [shape: f32[16,1], index: 6, kind: input, shape index: {}]
  %s7 = inlined_call_operand.vmem [shape: f32[16,1], index: 7, kind: input, shape index: {}]
  %s8 = inlined_call_operand.<no memory space> [shape: f32[1,1], index: 8, kind: input, shape index: {}]
  %s9 = inlined_call_operand.hbm [shape: f32[2,256], index: 9, kind: output, shape index: {}]
  %s10 = sld [smem:[#allocation0]]
  $region46: #{tpu_custom_call.1} parent=0
    _
  %s12 = ssub.s32 1, %s10
  %s13 = scalar_select 0, %s12, %s10
  %v14 = vstv %s8
  %15 = vst [vmem:[#allocation2] sm:$0x1] %v14
  $region1: #{tpu_custom_call.1} parent=0
    #allocation3 [shape = 'u8[2048]{0}', space=vmem, size = 0x800, scoped, tag = 'output window, operand 0, single buffered']
    #allocation4 [shape = 's32[1]{0}', space=sflag, size = 0x4, scoped, tag = 'scoped memory for tpu_custom_call.1']
    %16 = vsyncpa [#allocation4], 0
    // Predicated region
    $region2: #{tpu_custom_call.1} parent=1 // pred_check
      _
    $region3: #{tpu_custom_call.1} parent=1 // pred_check_branch
      %18 = sbr.rel (0) target = $region5
    $region4: #{tpu_custom_call.1} parent=1 // pred_region
      _
    $region5: #{tpu_custom_call.1} parent=1 // pred_fallthru
      _
    // Predicated region
    $region6: #{tpu_custom_call.1} parent=1 // pred_check
      _
    $region7: #{tpu_custom_call.1} parent=1 // pred_check_branch
      %20 = sbr.rel (0) target = $region9
    $region8: #{tpu_custom_call.1} parent=1 // pred_region
      _
    $region9: #{tpu_custom_call.1} parent=1 // pred_fallthru
      _
    // Predicated region
    $region10: #{tpu_custom_call.1} parent=1 // pred_check
      _
    $region11: #{tpu_custom_call.1} parent=1 // pred_check_branch
      %22 = sbr.rel (0) target = $region13
    $region12: #{tpu_custom_call.1} parent=1 // pred_region
      _
    $region13: #{tpu_custom_call.1} parent=1 // pred_fallthru
      _
    // Predicated region
    $region14: #{tpu_custom_call.1} parent=1 // pred_check
      _
    $region15: #{tpu_custom_call.1} parent=1 // pred_check_branch
      %24 = sbr.rel (0) target = $region17
    $region16: #{tpu_custom_call.1} parent=1 // pred_region
      _
    $region17: #{tpu_custom_call.1} parent=1 // pred_fallthru
      _
    // Predicated region
    $region18: #{tpu_custom_call.1} parent=1 // pred_check
      _
    $region19: #{tpu_custom_call.1} parent=1 // pred_check_branch
      %26 = sbr.rel (0) target = $region21
    $region20: #{tpu_custom_call.1} parent=1 // pred_region
      _
    $region21: #{tpu_custom_call.1} parent=1 // pred_fallthru
      _
    // Predicated region
    $region22: #{tpu_custom_call.1} parent=1 // pred_check
      _
    $region23: #{tpu_custom_call.1} parent=1 // pred_check_branch
      %28 = sbr.rel (0) target = $region25
    $region24: #{tpu_custom_call.1} parent=1 // pred_region
      _
    $region25: #{tpu_custom_call.1} parent=1 // pred_fallthru
      _
    // Predicated region
    $region26: #{tpu_custom_call.1} parent=1 // pred_check
      _
    $region27: #{tpu_custom_call.1} parent=1 // pred_check_branch
      %30 = sbr.rel (0) target = $region29
    $region28: #{tpu_custom_call.1} parent=1 // pred_region
      _
    $region29: #{tpu_custom_call.1} parent=1 // pred_fallthru
      _
    // Predicated region
    $region30: #{tpu_custom_call.1} parent=1 // pred_check
      _
    $region31: #{tpu_custom_call.1} parent=1 // pred_check_branch
      %32 = sbr.rel (0) target = $region33
    $region32: #{tpu_custom_call.1} parent=1 // pred_region
      _
    $region33: #{tpu_custom_call.1} parent=1 // pred_fallthru
      _
    // Predicated region
    $region34: #{tpu_custom_call.1} parent=1 // pred_check
      _
    $region35: #{tpu_custom_call.1} parent=1 // pred_check_branch
      %34 = sbr.rel (0) target = $region37
    $region36: #{tpu_custom_call.1} parent=1 // pred_region
      _
    $region37: #{tpu_custom_call.1} parent=1 // pred_fallthru
      _
    %v36 = vld [vmem:[%s0] sm:$0xf]
    %v37 = vld [vmem:[%s0 + $0x4] sm:$0xf]
    %v38 = vld [vmem:[%s0 + $0x8] sm:$0xf]
    %v39 = vld [vmem:[%s0 + $0xc] sm:$0xf]
    %v40 = vld [vmem:[%s0 + $0x10] sm:$0xf]
    %v41 = vld [vmem:[%s0 + $0x14] sm:$0xf]
    %v42 = vld [vmem:[%s0 + $0x18] sm:$0xf]
    %v43 = vld [vmem:[%s0 + $0x1c] sm:$0xf]
    %v44 = vld [vmem:[%s0 + $0x20] sm:$0xf]
    %v45 = vld [vmem:[%s0 + $0x24] sm:$0xf]
    %v46 = vld [vmem:[%s0 + $0x28] sm:$0xf]
    %v47 = vld [vmem:[%s0 + $0x2c] sm:$0xf]
    %v48 = vld [vmem:[%s0 + $0x30] sm:$0xf]
    %v49 = vld [vmem:[%s0 + $0x34] sm:$0xf]
    %v50 = vld [vmem:[%s0 + $0x38] sm:$0xf]
    %v51 = vld [vmem:[%s0 + $0x3c] sm:$0xf]
    %v52 = vld [vmem:[%s0 + $0x40] sm:$0xf]
    %v53 = vld [vmem:[%s0 + $0x44] sm:$0xf]
    %v54 = vld [vmem:[%s0 + $0x48] sm:$0xf]
    %v55 = vld [vmem:[%s0 + $0x4c] sm:$0xf]
    %v56 = vld [vmem:[%s0 + $0x50] sm:$0xf]
    %v57 = vld [vmem:[%s0 + $0x54] sm:$0xf]
    %v58 = vld [vmem:[%s0 + $0x58] sm:$0xf]
    %v59 = vld [vmem:[%s0 + $0x5c] sm:$0xf]
    %v60 = vld [vmem:[%s0 + $0x60] sm:$0xf]
    %v61 = vld [vmem:[%s0 + $0x64] sm:$0xf]
    %v62 = vld [vmem:[%s0 + $0x68] sm:$0xf]
    %v63 = vld [vmem:[%s0 + $0x6c] sm:$0xf]
    %v64 = vld [vmem:[%s0 + $0x70] sm:$0xf]
    %v65 = vld [vmem:[%s0 + $0x74] sm:$0xf]
    %v66 = vld [vmem:[%s0 + $0x78] sm:$0xf]
    %v67 = vld [vmem:[%s0 + $0x7c] sm:$0xf]
    %v68 = vld [vmem:[%s1] sm:$0xf]
    %v69 = vld [vmem:[%s1 + $0x4] sm:$0xf]
    %v70 = vld [vmem:[%s1 + $0x8] sm:$0xf]
    %v71 = vld [vmem:[%s1 + $0xc] sm:$0xf]
    %v72 = vld [vmem:[%s1 + $0x10] sm:$0xf]
    %v73 = vld [vmem:[%s1 + $0x14] sm:$0xf]
    %v74 = vld [vmem:[%s1 + $0x18] sm:$0xf]
    %v75 = vld [vmem:[%s1 + $0x1c] sm:$0xf]
    %v76 = vld [vmem:[%s2] sm:$0xff]
    %v77 = vld [vmem:[%s2 + $0x8] sm:$0xff]
    %v78 = vld [vmem:[%s2 + $0x10] sm:$0xff]
    %v79 = vld [vmem:[%s2 + $0x18] sm:$0xff]
    %v80 = vld [vmem:[%s2 + $0x20] sm:$0xff]
    %v81 = vld [vmem:[%s2 + $0x28] sm:$0xff]
    %v82 = vld [vmem:[%s2 + $0x30] sm:$0xff]
    %v83 = vld [vmem:[%s2 + $0x38] sm:$0xff]
    %85 = vset.pattern.permute.xlu0 0
    %86 = vperm.xlu0 %85, %v76
    %v87 = vpop.permute.xlu0 %86
    %90 = vset.pattern.permute.xlu0 0
    %91 = vperm.xlu0 %90, %v77
    %v92 = vpop.permute.xlu0 %91
    %95 = vset.pattern.permute.xlu0 0
    %96 = vperm.xlu0 %95, %v78
    %v97 = vpop.permute.xlu0 %96
    %100 = vset.pattern.permute.xlu0 0
    %101 = vperm.xlu0 %100, %v79
    %v102 = vpop.permute.xlu0 %101
    %105 = vset.pattern.permute.xlu0 0
    %106 = vperm.xlu0 %105, %v80
    %v107 = vpop.permute.xlu0 %106
    %110 = vset.pattern.permute.xlu0 0
    %111 = vperm.xlu0 %110, %v81
    %v112 = vpop.permute.xlu0 %111
    %115 = vset.pattern.permute.xlu0 0
    %116 = vperm.xlu0 %115, %v82
    %v117 = vpop.permute.xlu0 %116
    %120 = vset.pattern.permute.xlu0 0
    %121 = vperm.xlu0 %120, %v83
    %v122 = vpop.permute.xlu0 %121
    %v132 = vunpack.c.l.b16 %v68
    %v133 = vunpack.c.l.b16 %v69
    %v134 = vunpack.c.l.b16 %v70
    %v135 = vunpack.c.l.b16 %v71
    %v136 = vunpack.c.l.b16 %v72
    %v137 = vunpack.c.l.b16 %v73
    %v138 = vunpack.c.l.b16 %v74
    %v139 = vunpack.c.l.b16 %v75
    %v140 = vpack.c.b16 %v133, %v132
    %v141 = vpack.c.b16 %v135, %v134
    %v142 = vpack.c.b16 %v137, %v136
    %v143 = vpack.c.b16 %v139, %v138
    %v176 = vunpack.c.l.b16 %v36
    %v177 = vunpack.c.l.b16 %v37
    %v178 = vunpack.c.l.b16 %v38
    %v179 = vunpack.c.l.b16 %v39
    %v180 = vunpack.c.l.b16 %v40
    %v181 = vunpack.c.l.b16 %v41
    %v182 = vunpack.c.l.b16 %v42
    %v183 = vunpack.c.l.b16 %v43
    %v184 = vunpack.c.l.b16 %v44
    %v185 = vunpack.c.l.b16 %v45
    %v186 = vunpack.c.l.b16 %v46
    %v187 = vunpack.c.l.b16 %v47
    %v188 = vunpack.c.l.b16 %v48
    %v189 = vunpack.c.l.b16 %v49
    %v190 = vunpack.c.l.b16 %v50
    %v191 = vunpack.c.l.b16 %v51
    %v192 = vunpack.c.l.b16 %v52
    %v193 = vunpack.c.l.b16 %v53
    %v194 = vunpack.c.l.b16 %v54
    %v195 = vunpack.c.l.b16 %v55
    %v196 = vunpack.c.l.b16 %v56
    %v197 = vunpack.c.l.b16 %v57
    %v198 = vunpack.c.l.b16 %v58
    %v199 = vunpack.c.l.b16 %v59
    %v200 = vunpack.c.l.b16 %v60
    %v201 = vunpack.c.l.b16 %v61
    %v202 = vunpack.c.l.b16 %v62
    %v203 = vunpack.c.l.b16 %v63
    %v204 = vunpack.c.l.b16 %v64
    %v205 = vunpack.c.l.b16 %v65
    %v206 = vunpack.c.l.b16 %v66
    %v207 = vunpack.c.l.b16 %v67
    %v208 = vpack.c.b16 %v177, %v176
    %v209 = vpack.c.b16 %v179, %v178
    %v210 = vpack.c.b16 %v181, %v180
    %v211 = vpack.c.b16 %v183, %v182
    %v212 = vpack.c.b16 %v185, %v184
    %v213 = vpack.c.b16 %v187, %v186
    %v214 = vpack.c.b16 %v189, %v188
    %v215 = vpack.c.b16 %v191, %v190
    %v216 = vpack.c.b16 %v193, %v192
    %v217 = vpack.c.b16 %v195, %v194
    %v218 = vpack.c.b16 %v197, %v196
    %v219 = vpack.c.b16 %v199, %v198
    %v220 = vpack.c.b16 %v201, %v200
    %v221 = vpack.c.b16 %v203, %v202
    %v222 = vpack.c.b16 %v205, %v204
    %v223 = vpack.c.b16 %v207, %v206
    %vm224 = vcmask 261120
    %v226 = vsel %vm224, %v140, 0
    %v229 = vsel %vm224, %v141, 0
    %v232 = vsel %vm224, %v142, 0
    %v235 = vsel %vm224, %v143, 0
    %v238 = vsel %vm224, %v208, 0
    %v241 = vsel %vm224, %v209, 0
    %v244 = vsel %vm224, %v210, 0
    %v247 = vsel %vm224, %v211, 0
    %v250 = vsel %vm224, %v212, 0
    %v253 = vsel %vm224, %v213, 0
    %v256 = vsel %vm224, %v214, 0
    %v259 = vsel %vm224, %v215, 0
    %v262 = vsel %vm224, %v216, 0
    %v265 = vsel %vm224, %v217, 0
    %v268 = vsel %vm224, %v218, 0
    %v271 = vsel %vm224, %v219, 0
    %v274 = vsel %vm224, %v220, 0
    %v277 = vsel %vm224, %v221, 0
    %v280 = vsel %vm224, %v222, 0
    %v283 = vsel %vm224, %v223, 0
    %285 = vmatprep.subr.bf16.mxu0 0
    %286 = vmatpush1.bf16.xpose.msra.mxu0 %v259
    %287 = vmatprep.subr.bf16.mxu0 0
    %288 = vmatpush1.bf16.xpose.msra.mxu0 %v256
    %289 = vmatprep.subr.bf16.mxu0 0
    %290 = vmatpush1.bf16.xpose.msra.mxu0 %v253
    %291 = vmatprep.subr.bf16.mxu0 0
    %292 = vmatpush1.bf16.xpose.msra.mxu0 %v250
    %293 = vmatprep.subr.bf16.mxu0 0
    %294 = vmatpush1.bf16.xpose.msra.mxu0 %v247
    %295 = vmatprep.subr.bf16.mxu0 0
    %296 = vmatpush1.bf16.xpose.msra.mxu0 %v244
    %297 = vmatprep.subr.bf16.mxu0 0
    %298 = vmatpush1.bf16.xpose.msra.mxu0 %v241
    %299 = vmatprep.subr.bf16.mxu0 0
    %300 = vmatpush1.bf16.xpose.msra.mxu0 %v238
    %301 = vmatprep.subr.bf16.mxu0 0
    %302 = vmatpush2.bf16.xpose.msra.mxu0 %v283
    %303 = vmatprep.subr.bf16.mxu0 0
    %304 = vmatpush2.bf16.xpose.msra.mxu0 %v280
    %305 = vmatprep.subr.bf16.mxu0 0
    %306 = vmatpush2.bf16.xpose.msra.mxu0 %v277
    %307 = vmatprep.subr.bf16.mxu0 0
    %308 = vmatpush2.bf16.xpose.msra.mxu0 %v274
    %309 = vmatprep.subr.bf16.mxu0 0
    %310 = vmatpush2.bf16.xpose.msra.mxu0 %v271
    %311 = vmatprep.subr.bf16.mxu0 0
    %312 = vmatpush2.bf16.xpose.msra.mxu0 %v268
    %313 = vmatprep.subr.bf16.mxu0 0
    %314 = vmatpush2.bf16.xpose.msra.mxu0 %v265
    %315 = vmatprep.subr.bf16.mxu0 0
    %316 = vmatpush2.bf16.xpose.msra.mxu0 %v262
    %317 = vmatprep.mubr.bf16.mxu0 0
    %318 = vmatmul.mubr.bf16.gmra.mxu0 %v226
    %v319 = vpop.f32.mrf.mxu0
    %v320 = vadd.f32 %v87, %v319
    %v321 = vpop.f32.mrf.mxu0
    %v322 = vadd.f32 %v87, %v321
    %v323 = vpop.f32.mrf.mxu0
    %v324 = vadd.f32 %v92, %v323
    %v325 = vpop.f32.mrf.mxu0
    %v326 = vadd.f32 %v92, %v325
    %327 = vmatprep.mubr.bf16.mxu0 0
    %328 = vmatmul.mubr.bf16.gmra.mxu0 %v229
    %v329 = vpop.f32.mrf.mxu0
    %v330 = vadd.f32 %v97, %v329
    %v331 = vpop.f32.mrf.mxu0
    %v332 = vadd.f32 %v97, %v331
    %v333 = vpop.f32.mrf.mxu0
    %v334 = vadd.f32 %v102, %v333
    %v335 = vpop.f32.mrf.mxu0
    %v336 = vadd.f32 %v102, %v335
    %337 = vmatprep.mubr.bf16.mxu0 0
    %338 = vmatmul.mubr.bf16.gmra.mxu0 %v232
    %v339 = vpop.f32.mrf.mxu0
    %v340 = vadd.f32 %v107, %v339
    %v341 = vpop.f32.mrf.mxu0
    %v342 = vadd.f32 %v107, %v341
    %v343 = vpop.f32.mrf.mxu0
    %v344 = vadd.f32 %v112, %v343
    %v345 = vpop.f32.mrf.mxu0
    %v346 = vadd.f32 %v112, %v345
    %347 = vmatprep.mubr.bf16.mxu0 0
    %348 = vmatmul.mubr.bf16.gmra.mxu0 %v235
    %v349 = vpop.f32.mrf.mxu0
    %v350 = vadd.f32 %v117, %v349
    %v351 = vpop.f32.mrf.mxu0
    %v352 = vadd.f32 %v117, %v351
    %v353 = vpop.f32.mrf.mxu0
    %v354 = vadd.f32 %v122, %v353
    %v355 = vpop.f32.mrf.mxu0
    %v356 = vadd.f32 %v122, %v355
    %357 = vdwg.mxu0
    %v358 = vmax.f32 %v320, 0.0
    %v359 = vmax.f32 %v322, 0.0
    %v360 = vmax.f32 %v324, 0.0
    %v361 = vmax.f32 %v326, 0.0
    %v362 = vmax.f32 %v330, 0.0
    %v363 = vmax.f32 %v332, 0.0
    %v364 = vmax.f32 %v334, 0.0
    %v365 = vmax.f32 %v336, 0.0
    %v366 = vmax.f32 %v340, 0.0
    %v367 = vmax.f32 %v342, 0.0
    %v368 = vmax.f32 %v344, 0.0
    %v369 = vmax.f32 %v346, 0.0
    %v370 = vmax.f32 %v350, 0.0
    %v371 = vmax.f32 %v352, 0.0
    %v372 = vmax.f32 %v354, 0.0
    %v373 = vmax.f32 %v356, 0.0
    %v374 = vld [vmem:[%s3] sm:$0xf]
    %v375 = vld [vmem:[%s3 + $0x4] sm:$0xf]
    %v376 = vld [vmem:[%s3 + $0x8] sm:$0xf]
    %v377 = vld [vmem:[%s3 + $0xc] sm:$0xf]
    %v378 = vpack.c.bf16 %v360, %v358
    %v379 = vpack.c.bf16 %v361, %v359
    %v380 = vpack.c.bf16 %v364, %v362
    %v381 = vpack.c.bf16 %v365, %v363
    %v382 = vpack.c.bf16 %v368, %v366
    %v383 = vpack.c.bf16 %v369, %v367
    %v384 = vpack.c.bf16 %v372, %v370
    %v385 = vpack.c.bf16 %v373, %v371
    %v386 = vld [vmem:[%s4] sm:$0xff]
    %v387 = vld [vmem:[%s4 + $0x8] sm:$0xff]
    %v388 = vld [vmem:[%s4 + $0x10] sm:$0xff]
    %v389 = vld [vmem:[%s4 + $0x18] sm:$0xff]
    %391 = vset.pattern.permute.xlu0 0
    %392 = vperm.xlu0 %391, %v386
    %v393 = vpop.permute.xlu0 %392
    %396 = vset.pattern.permute.xlu0 0
    %397 = vperm.xlu0 %396, %v387
    %v398 = vpop.permute.xlu0 %397
    %401 = vset.pattern.permute.xlu0 0
    %402 = vperm.xlu0 %401, %v388
    %v403 = vpop.permute.xlu0 %402
    %406 = vset.pattern.permute.xlu0 0
    %407 = vperm.xlu0 %406, %v389
    %v408 = vpop.permute.xlu0 %407
    %v414 = vunpack.c.l.b16 %v374
    %v415 = vunpack.c.l.b16 %v375
    %v416 = vunpack.c.l.b16 %v376
    %v417 = vunpack.c.l.b16 %v377
    %v418 = vpack.c.b16 %v415, %v414
    %v419 = vpack.c.b16 %v417, %v416
    %vm420 = vcmask 523264
    %v422 = vsel %vm420, %v418, 0
    %v425 = vsel %vm420, %v419, 0
    %427 = vmatprep.subr.bf16.mxu0 0
    %428 = vmatpush1.bf16.msra.mxu0 0
    %429 = vmatprep.subr.bf16.mxu0 0
    %430 = vmatpush1.bf16.msra.mxu0 0
    %431 = vmatprep.subr.bf16.mxu0 0
    %432 = vmatpush1.bf16.msra.mxu0 0
    %433 = vmatprep.subr.bf16.mxu0 0
    %434 = vmatpush1.bf16.msra.mxu0 0
    %435 = vmatprep.subr.bf16.mxu0 %v385
    %436 = vmatpush1.bf16.msra.mxu0 %v384
    %437 = vmatprep.subr.bf16.mxu0 %v383
    %438 = vmatpush1.bf16.msra.mxu0 %v382
    %439 = vmatprep.subr.bf16.mxu0 %v381
    %440 = vmatpush1.bf16.msra.mxu0 %v380
    %441 = vmatprep.subr.bf16.mxu0 %v379
    %442 = vmatpush1.bf16.msra.mxu0 %v378
    %443 = vmatprep.subr.bf16.mxu0 0
    %444 = vmatpush2.bf16.msra.mxu0 0
    %445 = vmatprep.subr.bf16.mxu0 0
    %446 = vmatpush2.bf16.msra.mxu0 0
    %447 = vmatprep.subr.bf16.mxu0 0
    %448 = vmatpush2.bf16.msra.mxu0 0
    %449 = vmatprep.subr.bf16.mxu0 0
    %450 = vmatpush2.bf16.msra.mxu0 0
    %451 = vmatprep.subr.bf16.mxu0 0
    %452 = vmatpush2.bf16.msra.mxu0 0
    %453 = vmatprep.subr.bf16.mxu0 0
    %454 = vmatpush2.bf16.msra.mxu0 0
    %455 = vmatprep.subr.bf16.mxu0 0
    %456 = vmatpush2.bf16.msra.mxu0 0
    %457 = vmatprep.subr.bf16.mxu0 0
    %458 = vmatpush2.bf16.msra.mxu0 0
    %459 = vmatprep.mubr.bf16.mxu0 0
    %460 = vmatmul.mubr.bf16.gmra.mxu0 %v422
    %v461 = vpop.f32.mrf.mxu0
    %v462 = vadd.f32 %v393, %v461
    %v463 = vpop.f32.mrf.mxu0
    %v464 = vadd.f32 %v393, %v463
    %v465 = vpop.f32.mrf.mxu0
    %v466 = vadd.f32 %v398, %v465
    %v467 = vpop.f32.mrf.mxu0
    %v468 = vadd.f32 %v398, %v467
    %469 = vmatprep.mubr.bf16.mxu0 0
    %470 = vmatmul.mubr.bf16.gmra.mxu0 %v425
    %v471 = vpop.f32.mrf.mxu0
    %v472 = vadd.f32 %v403, %v471
    %v473 = vpop.f32.mrf.mxu0
    %v474 = vadd.f32 %v403, %v473
    %v475 = vpop.f32.mrf.mxu0
    %v476 = vadd.f32 %v408, %v475
    %v477 = vpop.f32.mrf.mxu0
    %v478 = vadd.f32 %v408, %v477
    %479 = vdwg.mxu0
    %v480 = vmax.f32 %v462, 0.0
    %v481 = vmax.f32 %v464, 0.0
    %v482 = vmax.f32 %v466, 0.0
    %v483 = vmax.f32 %v468, 0.0
    %v484 = vmax.f32 %v472, 0.0
    %v485 = vmax.f32 %v474, 0.0
    %v486 = vmax.f32 %v476, 0.0
    %v487 = vmax.f32 %v478, 0.0
    %v488 = vld [vmem:[%s5] sm:$0xf]
    %v489 = vld [vmem:[%s5 + $0x4] sm:$0xf]
    %v490 = vpack.c.bf16 %v482, %v480
    %v491 = vpack.c.bf16 %v483, %v481
    %v492 = vpack.c.bf16 %v486, %v484
    %v493 = vpack.c.bf16 %v487, %v485
    %v494 = vld [vmem:[%s6] sm:$0xff]
    %v495 = vld [vmem:[%s6 + $0x8] sm:$0xff]
    %497 = vset.pattern.permute.xlu0 0
    %498 = vperm.xlu0 %497, %v494
    %v499 = vpop.permute.xlu0 %498
    %502 = vset.pattern.permute.xlu0 0
    %503 = vperm.xlu0 %502, %v495
    %v504 = vpop.permute.xlu0 %503
    %v508 = vunpack.c.l.b16 %v488
    %v509 = vunpack.c.l.b16 %v489
    %v510 = vpack.c.b16 %v509, %v508
    %v512 = vsel %vm224, %v510, 0
    %514 = vmatprep.subr.bf16.mxu0 0
    %515 = vmatpush1.bf16.msra.mxu0 0
    %516 = vmatprep.subr.bf16.mxu0 0
    %517 = vmatpush1.bf16.msra.mxu0 0
    %518 = vmatprep.subr.bf16.mxu0 0
    %519 = vmatpush1.bf16.msra.mxu0 0
    %520 = vmatprep.subr.bf16.mxu0 0
    %521 = vmatpush1.bf16.msra.mxu0 0
    %522 = vmatprep.subr.bf16.mxu0 0
    %523 = vmatpush1.bf16.msra.mxu0 0
    %524 = vmatprep.subr.bf16.mxu0 0
    %525 = vmatpush1.bf16.msra.mxu0 0
    %526 = vmatprep.subr.bf16.mxu0 %v493
    %527 = vmatpush1.bf16.msra.mxu0 %v492
    %528 = vmatprep.subr.bf16.mxu0 %v491
    %529 = vmatpush1.bf16.msra.mxu0 %v490
    %530 = vmatprep.subr.bf16.mxu0 0
    %531 = vmatpush2.bf16.msra.mxu0 0
    %532 = vmatprep.subr.bf16.mxu0 0
    %533 = vmatpush2.bf16.msra.mxu0 0
    %534 = vmatprep.subr.bf16.mxu0 0
    %535 = vmatpush2.bf16.msra.mxu0 0
    %536 = vmatprep.subr.bf16.mxu0 0
    %537 = vmatpush2.bf16.msra.mxu0 0
    %538 = vmatprep.subr.bf16.mxu0 0
    %539 = vmatpush2.bf16.msra.mxu0 0
    %540 = vmatprep.subr.bf16.mxu0 0
    %541 = vmatpush2.bf16.msra.mxu0 0
    %542 = vmatprep.subr.bf16.mxu0 0
    %543 = vmatpush2.bf16.msra.mxu0 0
    %544 = vmatprep.subr.bf16.mxu0 0
    %545 = vmatpush2.bf16.msra.mxu0 0
    %546 = vmatprep.mubr.bf16.mxu0 0
    %547 = vmatmul.mubr.bf16.gmra.mxu0 %v512
    %v548 = vpop.f32.mrf.mxu0
    %v549 = vadd.f32 %v499, %v548
    %v550 = vpop.f32.mrf.mxu0
    %v551 = vadd.f32 %v499, %v550
    %v552 = vpop.f32.mrf.mxu0
    %v553 = vadd.f32 %v504, %v552
    %v554 = vpop.f32.mrf.mxu0
    %v555 = vadd.f32 %v504, %v554
    %556 = vdwg.mxu0
    %v557 = vmax.f32 %v549, 0.0
    %v558 = vmax.f32 %v551, 0.0
    %v559 = vmax.f32 %v553, 0.0
    %v560 = vmax.f32 %v555, 0.0
    %v561 = vld [vmem:[%s7] sm:$0xff]
    %v562 = vld [vmem:[%s7 + $0x8] sm:$0xff]
    %564 = vset.pattern.permute.xlu0 0
    %565 = vperm.xlu0 %564, %v561
    %v566 = vpop.permute.xlu0 %565
    %569 = vset.pattern.permute.xlu0 0
    %570 = vperm.xlu0 %569, %v562
    %v571 = vpop.permute.xlu0 %570
    %v573 = vmul.f32 %v557, %v566
    %v574 = vmul.f32 %v558, %v566
    %v575 = vmul.f32 %v559, %v571
    %v576 = vmul.f32 %v560, %v571
    %v577 = vadd.f32 %v573, %v575
    %v578 = vrot.slane %v577, 4
    %v579 = vadd.f32 %v577, %v578
    %v580 = vrot.slane %v579, 2
    %v581 = vadd.f32 %v579, %v580
    %v582 = vrot.slane %v581, 1
    %v583 = vadd.f32 %v581, %v582
    %v584 = vadd.f32 %v574, %v576
    %v585 = vrot.slane %v584, 4
    %v586 = vadd.f32 %v584, %v585
    %v587 = vrot.slane %v586, 2
    %v588 = vadd.f32 %v586, %v587
    %v589 = vrot.slane %v588, 1
    %v590 = vadd.f32 %v588, %v589
    %v591 = vld [vmem:[#allocation2] sm:$0x1]
    %593 = vset.pattern.permute.xlu0 0
    %594 = vperm.xlu0 %593, %v591
    %v595 = vpop.permute.xlu0 %594
    %v597 = vlaneseq
    %v598 = vshrl.u32 %v597, 7
    %v599 = vsub.s32 0, %v598
    %v600 = vrot.slane %v595, %v599
    %v601 = vadd.f32 %v583, %v600
    %v602 = vadd.f32 %v590, %v600
    %v603 = vmax.f32 %v601, %v602
    %604 = vmax.xlane.f32.xlu0 %v603
    %v605 = vpop.xlane.xlu0 %604
    %v606 = vsub.f32 %v601, %v605
    %v607 = vsub.f32 %v602, %v605
    %v608 = vmul.f32 %v606, 1.442695
    %v609 = vpow.pop %v608
    %v610 = vmul.f32 %v607, 1.442695
    %v611 = vpow.pop %v610
    %v612 = vadd.f32 %v609, %v611
    %613 = vadd.xlane.f32.xlu0 %v612
    %v614 = vpop.xlane.xlu0 %613
    %v615 = vrcp.pop %v614
    %v616 = vmul.f32 %v609, %v615
    %v617 = vmul.f32 %v611, %v615
    %s618 = scalar_lea.vmem %s0, 128
    %v619 = vld [vmem:[%s618] sm:$0xf]
    %v620 = vld [vmem:[%s618 + $0x4] sm:$0xf]
    %v621 = vld [vmem:[%s618 + $0x8] sm:$0xf]
    %v622 = vld [vmem:[%s618 + $0xc] sm:$0xf]
    %v623 = vld [vmem:[%s618 + $0x10] sm:$0xf]
    %v624 = vld [vmem:[%s618 + $0x14] sm:$0xf]
    %v625 = vld [vmem:[%s618 + $0x18] sm:$0xf]
    %v626 = vld [vmem:[%s618 + $0x1c] sm:$0xf]
    %v627 = vld [vmem:[%s618 + $0x20] sm:$0xf]
    %v628 = vld [vmem:[%s618 + $0x24] sm:$0xf]
    %v629 = vld [vmem:[%s618 + $0x28] sm:$0xf]
    %v630 = vld [vmem:[%s618 + $0x2c] sm:$0xf]
    %v631 = vld [vmem:[%s618 + $0x30] sm:$0xf]
    %v632 = vld [vmem:[%s618 + $0x34] sm:$0xf]
    %v633 = vld [vmem:[%s618 + $0x38] sm:$0xf]
    %v634 = vld [vmem:[%s618 + $0x3c] sm:$0xf]
    %v635 = vld [vmem:[%s618 + $0x40] sm:$0xf]
    %v636 = vld [vmem:[%s618 + $0x44] sm:$0xf]
    %v637 = vld [vmem:[%s618 + $0x48] sm:$0xf]
    %v638 = vld [vmem:[%s618 + $0x4c] sm:$0xf]
    %v639 = vld [vmem:[%s618 + $0x50] sm:$0xf]
    %v640 = vld [vmem:[%s618 + $0x54] sm:$0xf]
    %v641 = vld [vmem:[%s618 + $0x58] sm:$0xf]
    %v642 = vld [vmem:[%s618 + $0x5c] sm:$0xf]
    %v643 = vld [vmem:[%s618 + $0x60] sm:$0xf]
    %v644 = vld [vmem:[%s618 + $0x64] sm:$0xf]
    %v645 = vld [vmem:[%s618 + $0x68] sm:$0xf]
    %v646 = vld [vmem:[%s618 + $0x6c] sm:$0xf]
    %v647 = vld [vmem:[%s618 + $0x70] sm:$0xf]
    %v648 = vld [vmem:[%s618 + $0x74] sm:$0xf]
    %v649 = vld [vmem:[%s618 + $0x78] sm:$0xf]
    %v650 = vld [vmem:[%s618 + $0x7c] sm:$0xf]
    %v683 = vunpack.c.l.b16 %v619
    %v684 = vunpack.c.l.b16 %v620
    %v685 = vunpack.c.l.b16 %v621
    %v686 = vunpack.c.l.b16 %v622
    %v687 = vunpack.c.l.b16 %v623
    %v688 = vunpack.c.l.b16 %v624
    %v689 = vunpack.c.l.b16 %v625
    %v690 = vunpack.c.l.b16 %v626
    %v691 = vunpack.c.l.b16 %v627
    %v692 = vunpack.c.l.b16 %v628
    %v693 = vunpack.c.l.b16 %v629
    %v694 = vunpack.c.l.b16 %v630
    %v695 = vunpack.c.l.b16 %v631
    %v696 = vunpack.c.l.b16 %v632
    %v697 = vunpack.c.l.b16 %v633
    %v698 = vunpack.c.l.b16 %v634
    %v699 = vunpack.c.l.b16 %v635
    %v700 = vunpack.c.l.b16 %v636
    %v701 = vunpack.c.l.b16 %v637
    %v702 = vunpack.c.l.b16 %v638
    %v703 = vunpack.c.l.b16 %v639
    %v704 = vunpack.c.l.b16 %v640
    %v705 = vunpack.c.l.b16 %v641
    %v706 = vunpack.c.l.b16 %v642
    %v707 = vunpack.c.l.b16 %v643
    %v708 = vunpack.c.l.b16 %v644
    %v709 = vunpack.c.l.b16 %v645
    %v710 = vunpack.c.l.b16 %v646
    %v711 = vunpack.c.l.b16 %v647
    %v712 = vunpack.c.l.b16 %v648
    %v713 = vunpack.c.l.b16 %v649
    %v714 = vunpack.c.l.b16 %v650
    %v715 = vpack.c.b16 %v684, %v683
    %v716 = vpack.c.b16 %v686, %v685
    %v717 = vpack.c.b16 %v688, %v687
    %v718 = vpack.c.b16 %v690, %v689
    %v719 = vpack.c.b16 %v692, %v691
    %v720 = vpack.c.b16 %v694, %v693
    %v721 = vpack.c.b16 %v696, %v695
    %v722 = vpack.c.b16 %v698, %v697
    %v723 = vpack.c.b16 %v700, %v699
    %v724 = vpack.c.b16 %v702, %v701
    %v725 = vpack.c.b16 %v704, %v703
    %v726 = vpack.c.b16 %v706, %v705
    %v727 = vpack.c.b16 %v708, %v707
    %v728 = vpack.c.b16 %v710, %v709
    %v729 = vpack.c.b16 %v712, %v711
    %v730 = vpack.c.b16 %v714, %v713
    %v732 = vsel %vm224, %v715, 0
    %v735 = vsel %vm224, %v716, 0
    %v738 = vsel %vm224, %v717, 0
    %v741 = vsel %vm224, %v718, 0
    %v744 = vsel %vm224, %v719, 0
    %v747 = vsel %vm224, %v720, 0
    %v750 = vsel %vm224, %v721, 0
    %v753 = vsel %vm224, %v722, 0
    %v756 = vsel %vm224, %v723, 0
    %v759 = vsel %vm224, %v724, 0
    %v762 = vsel %vm224, %v725, 0
    %v765 = vsel %vm224, %v726, 0
    %v768 = vsel %vm224, %v727, 0
    %v771 = vsel %vm224, %v728, 0
    %v774 = vsel %vm224, %v729, 0
    %v777 = vsel %vm224, %v730, 0
    %779 = vmatprep.subr.bf16.mxu0 0
    %780 = vmatpush1.bf16.xpose.msra.mxu0 %v753
    %781 = vmatprep.subr.bf16.mxu0 0
    %782 = vmatpush1.bf16.xpose.msra.mxu0 %v750
    %783 = vmatprep.subr.bf16.mxu0 0
    %784 = vmatpush1.bf16.xpose.msra.mxu0 %v747
    %785 = vmatprep.subr.bf16.mxu0 0
    %786 = vmatpush1.bf16.xpose.msra.mxu0 %v744
    %787 = vmatprep.subr.bf16.mxu0 0
    %788 = vmatpush1.bf16.xpose.msra.mxu0 %v741
    %789 = vmatprep.subr.bf16.mxu0 0
    %790 = vmatpush1.bf16.xpose.msra.mxu0 %v738
    %791 = vmatprep.subr.bf16.mxu0 0
    %792 = vmatpush1.bf16.xpose.msra.mxu0 %v735
    %793 = vmatprep.subr.bf16.mxu0 0
    %794 = vmatpush1.bf16.xpose.msra.mxu0 %v732
    %795 = vmatprep.subr.bf16.mxu0 0
    %796 = vmatpush2.bf16.xpose.msra.mxu0 %v777
    %797 = vmatprep.subr.bf16.mxu0 0
    %798 = vmatpush2.bf16.xpose.msra.mxu0 %v774
    %799 = vmatprep.subr.bf16.mxu0 0
    %800 = vmatpush2.bf16.xpose.msra.mxu0 %v771
    %801 = vmatprep.subr.bf16.mxu0 0
    %802 = vmatpush2.bf16.xpose.msra.mxu0 %v768
    %803 = vmatprep.subr.bf16.mxu0 0
    %804 = vmatpush2.bf16.xpose.msra.mxu0 %v765
    %805 = vmatprep.subr.bf16.mxu0 0
    %806 = vmatpush2.bf16.xpose.msra.mxu0 %v762
    %807 = vmatprep.subr.bf16.mxu0 0
    %808 = vmatpush2.bf16.xpose.msra.mxu0 %v759
    %809 = vmatprep.subr.bf16.mxu0 0
    %810 = vmatpush2.bf16.xpose.msra.mxu0 %v756
    %811 = vmatprep.mubr.bf16.mxu0 0
    %812 = vmatmul.mubr.bf16.gmra.mxu0 %v226
    %v813 = vpop.f32.mrf.mxu0
    %v814 = vadd.f32 %v87, %v813
    %v815 = vpop.f32.mrf.mxu0
    %v816 = vadd.f32 %v87, %v815
    %v817 = vpop.f32.mrf.mxu0
    %v818 = vadd.f32 %v92, %v817
    %v819 = vpop.f32.mrf.mxu0
    %v820 = vadd.f32 %v92, %v819
    %821 = vmatprep.mubr.bf16.mxu0 0
    %822 = vmatmul.mubr.bf16.gmra.mxu0 %v229
    %v823 = vpop.f32.mrf.mxu0
    %v824 = vadd.f32 %v97, %v823
    %v825 = vpop.f32.mrf.mxu0
    %v826 = vadd.f32 %v97, %v825
    %v827 = vpop.f32.mrf.mxu0
    %v828 = vadd.f32 %v102, %v827
    %v829 = vpop.f32.mrf.mxu0
    %v830 = vadd.f32 %v102, %v829
    %831 = vmatprep.mubr.bf16.mxu0 0
    %832 = vmatmul.mubr.bf16.gmra.mxu0 %v232
    %v833 = vpop.f32.mrf.mxu0
    %v834 = vadd.f32 %v107, %v833
    %v835 = vpop.f32.mrf.mxu0
    %v836 = vadd.f32 %v107, %v835
    %v837 = vpop.f32.mrf.mxu0
    %v838 = vadd.f32 %v112, %v837
    %v839 = vpop.f32.mrf.mxu0
    %v840 = vadd.f32 %v112, %v839
    %841 = vmatprep.mubr.bf16.mxu0 0
    %842 = vmatmul.mubr.bf16.gmra.mxu0 %v235
    %v843 = vpop.f32.mrf.mxu0
    %v844 = vadd.f32 %v117, %v843
    %v845 = vpop.f32.mrf.mxu0
    %v846 = vadd.f32 %v117, %v845
    %v847 = vpop.f32.mrf.mxu0
    %v848 = vadd.f32 %v122, %v847
    %v849 = vpop.f32.mrf.mxu0
    %v850 = vadd.f32 %v122, %v849
    %851 = vdwg.mxu0
    %v852 = vmax.f32 %v814, 0.0
    %v853 = vmax.f32 %v816, 0.0
    %v854 = vmax.f32 %v818, 0.0
    %v855 = vmax.f32 %v820, 0.0
    %v856 = vmax.f32 %v824, 0.0
    %v857 = vmax.f32 %v826, 0.0
    %v858 = vmax.f32 %v828, 0.0
    %v859 = vmax.f32 %v830, 0.0
    %v860 = vmax.f32 %v834, 0.0
    %v861 = vmax.f32 %v836, 0.0
    %v862 = vmax.f32 %v838, 0.0
    %v863 = vmax.f32 %v840, 0.0
    %v864 = vmax.f32 %v844, 0.0
    %v865 = vmax.f32 %v846, 0.0
    %v866 = vmax.f32 %v848, 0.0
    %v867 = vmax.f32 %v850, 0.0
    %v868 = vpack.c.bf16 %v854, %v852
    %v869 = vpack.c.bf16 %v855, %v853
    %v870 = vpack.c.bf16 %v858, %v856
    %v871 = vpack.c.bf16 %v859, %v857
    %v872 = vpack.c.bf16 %v862, %v860
    %v873 = vpack.c.bf16 %v863, %v861
    %v874 = vpack.c.bf16 %v866, %v864
    %v875 = vpack.c.bf16 %v867, %v865
    %876 = vmatprep.subr.bf16.mxu0 0
    %877 = vmatpush1.bf16.msra.mxu0 0
    %878 = vmatprep.subr.bf16.mxu0 0
    %879 = vmatpush1.bf16.msra.mxu0 0
    %880 = vmatprep.subr.bf16.mxu0 0
    %881 = vmatpush1.bf16.msra.mxu0 0
    %882 = vmatprep.subr.bf16.mxu0 0
    %883 = vmatpush1.bf16.msra.mxu0 0
    %884 = vmatprep.subr.bf16.mxu0 %v875
    %885 = vmatpush1.bf16.msra.mxu0 %v874
    %886 = vmatprep.subr.bf16.mxu0 %v873
    %887 = vmatpush1.bf16.msra.mxu0 %v872
    %888 = vmatprep.subr.bf16.mxu0 %v871
    %889 = vmatpush1.bf16.msra.mxu0 %v870
    %890 = vmatprep.subr.bf16.mxu0 %v869
    %891 = vmatpush1.bf16.msra.mxu0 %v868
    %892 = vmatprep.subr.bf16.mxu0 0
    %893 = vmatpush2.bf16.msra.mxu0 0
    %894 = vmatprep.subr.bf16.mxu0 0
    %895 = vmatpush2.bf16.msra.mxu0 0
    %896 = vmatprep.subr.bf16.mxu0 0
    %897 = vmatpush2.bf16.msra.mxu0 0
    %898 = vmatprep.subr.bf16.mxu0 0
    %899 = vmatpush2.bf16.msra.mxu0 0
    %900 = vmatprep.subr.bf16.mxu0 0
    %901 = vmatpush2.bf16.msra.mxu0 0
    %902 = vmatprep.subr.bf16.mxu0 0
    %903 = vmatpush2.bf16.msra.mxu0 0
    %904 = vmatprep.subr.bf16.mxu0 0
    %905 = vmatpush2.bf16.msra.mxu0 0
    %906 = vmatprep.subr.bf16.mxu0 0
    %907 = vmatpush2.bf16.msra.mxu0 0
    %908 = vmatprep.mubr.bf16.mxu0 0
    %909 = vmatmul.mubr.bf16.gmra.mxu0 %v422
    %v910 = vpop.f32.mrf.mxu0
    %v911 = vadd.f32 %v393, %v910
    %v912 = vpop.f32.mrf.mxu0
    %v913 = vadd.f32 %v393, %v912
    %v914 = vpop.f32.mrf.mxu0
    %v915 = vadd.f32 %v398, %v914
    %v916 = vpop.f32.mrf.mxu0
    %v917 = vadd.f32 %v398, %v916
    %918 = vmatprep.mubr.bf16.mxu0 0
    %919 = vmatmul.mubr.bf16.gmra.mxu0 %v425
    %v920 = vpop.f32.mrf.mxu0
    %v921 = vadd.f32 %v403, %v920
    %v922 = vpop.f32.mrf.mxu0
    %v923 = vadd.f32 %v403, %v922
    %v924 = vpop.f32.mrf.mxu0
    %v925 = vadd.f32 %v408, %v924
    %v926 = vpop.f32.mrf.mxu0
    %v927 = vadd.f32 %v408, %v926
    %928 = vdwg.mxu0
    %v929 = vmax.f32 %v911, 0.0
    %v930 = vmax.f32 %v913, 0.0
    %v931 = vmax.f32 %v915, 0.0
    %v932 = vmax.f32 %v917, 0.0
    %v933 = vmax.f32 %v921, 0.0
    %v934 = vmax.f32 %v923, 0.0
    %v935 = vmax.f32 %v925, 0.0
    %v936 = vmax.f32 %v927, 0.0
    %v937 = vpack.c.bf16 %v931, %v929
    %v938 = vpack.c.bf16 %v932, %v930
    %v939 = vpack.c.bf16 %v935, %v933
    %v940 = vpack.c.bf16 %v936, %v934
    %941 = vmatprep.subr.bf16.mxu0 0
    %942 = vmatpush1.bf16.msra.mxu0 0
    %943 = vmatprep.subr.bf16.mxu0 0
    %944 = vmatpush1.bf16.msra.mxu0 0
    %945 = vmatprep.subr.bf16.mxu0 0
    %946 = vmatpush1.bf16.msra.mxu0 0
    %947 = vmatprep.subr.bf16.mxu0 0
    %948 = vmatpush1.bf16.msra.mxu0 0
    %949 = vmatprep.subr.bf16.mxu0 0
    %950 = vmatpush1.bf16.msra.mxu0 0
    %951 = vmatprep.subr.bf16.mxu0 0
    %952 = vmatpush1.bf16.msra.mxu0 0
    %953 = vmatprep.subr.bf16.mxu0 %v940
    %954 = vmatpush1.bf16.msra.mxu0 %v939
    %955 = vmatprep.subr.bf16.mxu0 %v938
    %956 = vmatpush1.bf16.msra.mxu0 %v937
    %957 = vmatprep.subr.bf16.mxu0 0
    %958 = vmatpush2.bf16.msra.mxu0 0
    %959 = vmatprep.subr.bf16.mxu0 0
    %960 = vmatpush2.bf16.msra.mxu0 0
    %961 = vmatprep.subr.bf16.mxu0 0
    %962 = vmatpush2.bf16.msra.mxu0 0
    %963 = vmatprep.subr.bf16.mxu0 0
    %964 = vmatpush2.bf16.msra.mxu0 0
    %965 = vmatprep.subr.bf16.mxu0 0
    %966 = vmatpush2.bf16.msra.mxu0 0
    %967 = vmatprep.subr.bf16.mxu0 0
    %968 = vmatpush2.bf16.msra.mxu0 0
    %969 = vmatprep.subr.bf16.mxu0 0
    %970 = vmatpush2.bf16.msra.mxu0 0
    %971 = vmatprep.subr.bf16.mxu0 0
    %972 = vmatpush2.bf16.msra.mxu0 0
    %973 = vmatprep.mubr.bf16.mxu0 0
    %974 = vmatmul.mubr.bf16.gmra.mxu0 %v512
    %v975 = vpop.f32.mrf.mxu0
    %v976 = vadd.f32 %v499, %v975
    %v977 = vpop.f32.mrf.mxu0
    %v978 = vadd.f32 %v499, %v977
    %v979 = vpop.f32.mrf.mxu0
    %v980 = vadd.f32 %v504, %v979
    %v981 = vpop.f32.mrf.mxu0
    %v982 = vadd.f32 %v504, %v981
    %983 = vdwg.mxu0
    %v984 = vmax.f32 %v976, 0.0
    %v985 = vmax.f32 %v978, 0.0
    %v986 = vmax.f32 %v980, 0.0
    %v987 = vmax.f32 %v982, 0.0
    %v988 = vmul.f32 %v984, %v566
    %v989 = vmul.f32 %v985, %v566
    %v990 = vmul.f32 %v986, %v571
    %v991 = vmul.f32 %v987, %v571
    %v992 = vadd.f32 %v988, %v990
    %v993 = vrot.slane %v992, 4
    %v994 = vadd.f32 %v992, %v993
    %v995 = vrot.slane %v994, 2
    %v996 = vadd.f32 %v994, %v995
    %v997 = vrot.slane %v996, 1
    %v998 = vadd.f32 %v996, %v997
    %v999 = vadd.f32 %v989, %v991
    %v1000 = vrot.slane %v999, 4
    %v1001 = vadd.f32 %v999, %v1000
    %v1002 = vrot.slane %v1001, 2
    %v1003 = vadd.f32 %v1001, %v1002
    %v1004 = vrot.slane %v1003, 1
    %v1005 = vadd.f32 %v1003, %v1004
    %v1006 = vadd.f32 %v998, %v600
    %v1007 = vadd.f32 %v1005, %v600
    %v1008 = vmax.f32 %v1006, %v1007
    %1009 = vmax.xlane.f32.xlu0 %v1008
    %v1010 = vpop.xlane.xlu0 %1009
    %v1011 = vsub.f32 %v1006, %v1010
    %v1012 = vsub.f32 %v1007, %v1010
    %v1013 = vmul.f32 %v1011, 1.442695
    %v1014 = vpow.pop %v1013
    %v1015 = vmul.f32 %v1012, 1.442695
    %v1016 = vpow.pop %v1015
    %v1017 = vadd.f32 %v1014, %v1016
    %1018 = vadd.xlane.f32.xlu0 %v1017
    %v1019 = vpop.xlane.xlu0 %1018
    %v1020 = vrcp.pop %v1019
    %v1021 = vmul.f32 %v1014, %v1020
    %v1022 = vmul.f32 %v1016, %v1020
    %vm1023 = vcmask 1040384
    %v1024 = vsel %vm1023, %v616, %v1021
    %v1025 = vsel %vm1023, %v617, %v1022
    %v1028 = vcombine.low %v1024, %v1025
    %v1030 = vunpack.c.l.s4 1983009808
    %v1031 = vunpack.c.0.s8 %v1030
    %v1032 = vlaneseq
    %v1033 = vshrl.u32 %v1032, 7
    %v1034 = vsub.s32 %v1031, %v1033
    %v1035 = vrot.slane %v1028, %v1034
    %1037 = vst [vmem:[#allocation3] sm:$0xf] %v1035
    // Predicated region
    $region38: #{tpu_custom_call.1} parent=1 // pred_check
      _
    $region39: #{tpu_custom_call.1} parent=1 // pred_check_branch
      %1039 = sbr.rel (0) target = $region41
    $region40: #{tpu_custom_call.1} parent=1 // pred_region
      %s1041 = ssub.s32 64, 64
      %1042 = vsyncadd [#allocation4], %s1041
      %s1044 = sshll.u32 [#allocation3], 4
      %s1045 = int_to_ptr.vmem [resolvable:$true] %s1044
      %1047 = dma.vmem_to_hbm [thread:$0]  %s1045, 64, %s9, [#allocation4]
    $region41: #{tpu_custom_call.1} parent=1 // pred_fallthru
      _
    // Predicated region
    $region42: #{tpu_custom_call.1} parent=1 // pred_check
      _
    $region43: #{tpu_custom_call.1} parent=1 // pred_check_branch
      %1049 = sbr.rel (0) target = $region45
    $region44: #{tpu_custom_call.1} parent=1 // pred_region
      %1050 = dma.done [#allocation4], 64
    $region45: #{tpu_custom_call.1} parent=1 // pred_fallthru
      _
    %1051 = vsyncpa [#allocation4], 1

</llo_original>
